<compile_context>
chip_gen: v7x
topology: tpu7x:2x2x1
jax: 0.10.0
libtpu: 0.0.40
codegen_flags: <defaults>
</compile_context>

<pallas_src>
import jax
import jax.numpy as jnp
from jax.experimental import pallas as pl
from jax.experimental.pallas import tpu as pltpu

_LANES = 128


def _idiv_const(v, c):
    """v // c for a compile-time positive int c (shift when power of two)."""
    if c == 1:
        return v
    if (c & (c - 1)) == 0:
        return v >> (c.bit_length() - 1)
    return v // c


def _imod_const(v, c):
    """v % c for a compile-time positive int c (mask when power of two)."""
    if c == 1:
        return jnp.zeros_like(v)
    if (c & (c - 1)) == 0:
        return v & (c - 1)
    return v % c


def _make_backproject_kernel(width, rows):
    W = int(width)

    def kernel(invk_ref, d_ref, out_ref):
        # invk_ref: (B*9,) f32 in SMEM  (row-major 3x3 inverse intrinsics)
        # d_ref:    (1, rows, 128)      depth tile (native dtype)
        # out_ref:  (1, 4, rows, 128)   homogeneous 3D points tile (f32)
        b = pl.program_id(0)
        n = pl.program_id(1)

        # Pixel coordinates generated in-kernel: the flat pixel index of
        # element (sublane, lane) of this tile is
        #   p = (n*rows + sublane)*128 + lane,   x = p % W,   y = p // W.
        sub = jax.lax.broadcasted_iota(jnp.int32, (rows, _LANES), 0)
        lane = jax.lax.broadcasted_iota(jnp.int32, (rows, _LANES), 1)
        rr = n * rows + sub

        if W % _LANES == 0:
            wl = W // _LANES            # 128-lane blocks per image row
            y_i = _idiv_const(rr, wl)
            x_i = _imod_const(rr, wl) * _LANES + lane
        elif _LANES % W == 0:
            k = _LANES // W             # image rows per 128-lane sublane row
            y_i = rr * k + _idiv_const(lane, W)
            x_i = _imod_const(lane, W)
        else:
            p = rr * _LANES + lane
            y_i = p // W
            x_i = p - y_i * W

        x = x_i.astype(jnp.float32)
        y = y_i.astype(jnp.float32)
        d = d_ref[0].astype(jnp.float32)   # cast in-kernel (native-dtype input)

        base = b * 9
        k00 = invk_ref[base + 0]; k01 = invk_ref[base + 1]; k02 = invk_ref[base + 2]
        k10 = invk_ref[base + 3]; k11 = invk_ref[base + 4]; k12 = invk_ref[base + 5]
        k20 = invk_ref[base + 6]; k21 = invk_ref[base + 7]; k22 = invk_ref[base + 8]

        # cam = depth * (inv_K[:3,:3] @ [x; y; 1]) as scalar-broadcast VPU FMAs.
        out_ref[0, 0] = d * (k00 * x + k01 * y + k02)
        out_ref[0, 1] = d * (k10 * x + k11 * y + k12)
        out_ref[0, 2] = d * (k20 * x + k21 * y + k22)
        out_ref[0, 3] = jnp.ones_like(d)   # homogeneous "ones" channel

    return kernel


def _choose_tiling(R, B, *, max_rows=1024, min_steps=4):
    """Pick (rows, R_pad): rows = sublane rows per tile, R_pad = padded row
    extent (== R whenever a clean divisor exists).

    rows must be a multiple of 8 or equal to the full extent.  Prefer the
    largest tile that still yields >= min_steps total grid steps (v7x has two
    TensorCores sharing HBM); otherwise just the largest divisor."""
    cands = []
    if R <= max_rows:
        cands.append(R)
    cands.extend(r for r in range(8, min(max_rows, R) + 1, 8) if R % r == 0)
    if cands:
        ok = [r for r in cands if B * (R // r) >= min_steps]
        rows = max(ok) if ok else max(cands)
        return rows, R
    # Awkward R (> max_rows and not a multiple of 8): pad the row axis to a
    # tile multiple instead of taking one giant block (bounded VMEM on v7x).
    rows = max_rows
    return rows, ((R + rows - 1) // rows) * rows


def backproject(depth, inv_K, *, batch_size, height, width):
    """Pallas implementation of Backproject.forward.

    depth:  any shape with batch_size*height*width elements (e.g. (B,1,H,W)),
            any float dtype (cast to f32 in-kernel)
    inv_K:  (B, 4, 4) inverse camera intrinsics
    returns (B, 4, H*W) float32 homogeneous camera points
    """
    B, H, W = batch_size, height, width
    HW = H * W
    assert HW % _LANES == 0, "height*width must be a multiple of 128"
    R = HW // _LANES

    rows, r_pad = _choose_tiling(R, B)

    depth_r = depth.reshape(B, R, _LANES)          # free, contiguous reshape
    if r_pad != R:
        depth_r = jnp.pad(depth_r, ((0, 0), (0, r_pad - R), (0, 0)))

    invk9 = inv_K[:, :3, :3].astype(jnp.float32).reshape(B * 9)  # flat SMEM table

    grid = (B, r_pad // rows)

    out4 = pl.pallas_call(
        _make_backproject_kernel(W, rows),
        out_shape=jax.ShapeDtypeStruct((B, 4, r_pad, _LANES), jnp.float32),
        grid=grid,
        in_specs=[
            # Whole flat inverse-intrinsics table lives in SMEM.
            pl.BlockSpec(memory_space=pltpu.MemorySpace.SMEM),
            pl.BlockSpec((1, rows, _LANES), lambda b, n: (b, n, 0)),
        ],
        out_specs=pl.BlockSpec((1, 4, rows, _LANES), lambda b, n: (b, 0, n, 0)),
        compiler_params=pltpu.CompilerParams(
            dimension_semantics=("parallel", "parallel")
        ),
    )(invk9, depth_r)

    if r_pad != R:
        out4 = out4[:, :, :R, :]
    # Free, contiguous reshape to the module's (B, 4, H*W) channel-major output.
    return out4.reshape(B, 4, HW)


def _backproject_ref(depth, inv_K, *, batch_size, height, width):
    """Pure-JAX reference mirroring the PyTorch module exactly."""
    B, H, W = batch_size, height, width
    HW = H * W
    xs = jnp.tile(jnp.arange(W, dtype=jnp.float32)[None, :], (H, 1)).reshape(-1)
    ys = jnp.tile(jnp.arange(H, dtype=jnp.float32)[:, None], (1, W)).reshape(-1)
    pix = jnp.concatenate(
        [jnp.stack([xs, ys], axis=0), jnp.ones((1, HW), jnp.float32)], axis=0
    )
    pix = jnp.broadcast_to(pix[None], (B, 3, HW))
    cam = jnp.matmul(inv_K[:, :3, :3], pix)
    cam = depth.reshape(B, 1, HW).astype(jnp.float32) * cam
    ones = jnp.ones((B, 1, HW), jnp.float32)
    return jnp.concatenate([cam, ones], axis=1)


def _make_inputs(key, B, H, W):
    k1, k2, k3 = jax.random.split(key, 3)
    depth = 1.0 + 2.0 * jax.random.uniform(k1, (B, 1, H, W), dtype=jnp.float32)
    fx = W / 2.0 + 0.1 * jax.random.uniform(k2, (B,))
    fy = H / 2.0 + 0.1 * jax.random.uniform(k3, (B,))
    cx = jnp.full((B,), W / 2.0)
    cy = jnp.full((B,), H / 2.0)
    inv_K = jnp.tile(jnp.eye(4, dtype=jnp.float32)[None], (B, 1, 1))
    inv_K = inv_K.at[:, 0, 0].set(1.0 / fx)
    inv_K = inv_K.at[:, 1, 1].set(1.0 / fy)
    inv_K = inv_K.at[:, 0, 2].set(-cx / fx)
    inv_K = inv_K.at[:, 1, 2].set(-cy / fy)
    return depth, inv_K


if __name__ == "__main__":
    key = jax.random.PRNGKey(0)
    k_a, k_b = jax.random.split(key)

    # Case 1: 128 % W == 0 fast path (module's typical small config).
    B, H, W = 2, 16, 16
    depth, inv_K = _make_inputs(k_a, B, H, W)
    out = jax.block_until_ready(
        backproject(depth, inv_K, batch_size=B, height=H, width=W)
    )
    ref = _backproject_ref(depth, inv_K, batch_size=B, height=H, width=W)
    assert out.shape == (B, 4, H * W)
    assert jnp.allclose(out, ref, atol=1e-4, rtol=1e-4)

    # Case 2: W % 128 == 0 fast path.
    B2, H2, W2 = 1, 4, 128
    depth2, inv_K2 = _make_inputs(k_b, B2, H2, W2)
    out2 = jax.block_until_ready(
        backproject(depth2, inv_K2, batch_size=B2, height=H2, width=W2)
    )
    ref2 = _backproject_ref(depth2, inv_K2, batch_size=B2, height=H2, width=W2)
    assert out2.shape == (B2, 4, H2 * W2)
    assert jnp.allclose(out2, ref2, atol=1e-4, rtol=1e-4)

    print("KERNEL_OK")
</pallas_src>

<mosaic_0001>
module attributes {stable_mosaic.version = 11 : i64} {
  func.func @kernel(%arg0: i32, %arg1: i32, %arg2: memref<18xf32, #tpu.memory_space<smem>>, %arg3: memref<1x2x128xf32, #tpu.memory_space<vmem>>, %arg4: memref<1x4x2x128xf32, #tpu.memory_space<vmem>>) attributes {dimension_semantics = [#tpu.dimension_semantics<parallel>, #tpu.dimension_semantics<parallel>], iteration_bounds = array<i64: 2, 1>, scalar_prefetch = 0 : i64, scratch_operands = 0 : i64, tpu.core_type = #tpu.core_type<tc>, window_params = [{transform_indices = @transform_0, window_bounds = array<i64: 18>}, {transform_indices = @transform_1, window_bounds = array<i64: 1, 2, 128>}, {transform_indices = @transform_2, window_bounds = array<i64: 1, 4, 2, 128>}]} {
    %0 = tpu.iota {dimensions = array<i32: 0>} : vector<2x128xi32>
    %1 = tpu.iota {dimensions = array<i32: 1>} : vector<2x128xi32>
    %c2_i32 = arith.constant 2 : i32
    %2 = arith.muli %arg1, %c2_i32 : i32
    %3 = vector.broadcast %2 : i32 to vector<2x128xi32>
    %4 = arith.addi %3, %0 : vector<2x128xi32>
    %c8_i32 = arith.constant 8 : i32
    %5 = vector.broadcast %c8_i32 : i32 to vector<2x128xi32>
    %6 = arith.muli %4, %5 : vector<2x128xi32>
    %c4_i32 = arith.constant 4 : i32
    %7 = vector.broadcast %c4_i32 : i32 to vector<2x128xi32>
    %8 = arith.shrsi %1, %7 : vector<2x128xi32>
    %9 = arith.addi %6, %8 : vector<2x128xi32>
    %c15_i32 = arith.constant 15 : i32
    %10 = vector.broadcast %c15_i32 : i32 to vector<2x128xi32>
    %11 = arith.andi %1, %10 : vector<2x128xi32>
    %12 = arith.sitofp %11 : vector<2x128xi32> to vector<2x128xf32>
    %13 = arith.sitofp %9 : vector<2x128xi32> to vector<2x128xf32>
    %c0 = arith.constant 0 : index
    %c0_0 = arith.constant 0 : index
    %c0_1 = arith.constant 0 : index
    %14 = vector.load %arg3[%c0, %c0_0, %c0_1] : memref<1x2x128xf32, #tpu.memory_space<vmem>>, vector<1x2x128xf32>
    %15 = vector.shape_cast %14 : vector<1x2x128xf32> to vector<2x128xf32>
    %c9_i32 = arith.constant 9 : i32
    %16 = arith.muli %arg0, %c9_i32 : i32
    %c0_i32 = arith.constant 0 : i32
    %17 = arith.addi %16, %c0_i32 : i32
    %18 = arith.index_cast %17 : i32 to index
    %19 = memref.load %arg2[%18] : memref<18xf32, #tpu.memory_space<smem>>
    %c1_i32 = arith.constant 1 : i32
    %20 = arith.addi %16, %c1_i32 : i32
    %21 = arith.index_cast %20 : i32 to index
    %22 = memref.load %arg2[%21] : memref<18xf32, #tpu.memory_space<smem>>
    %c2_i32_2 = arith.constant 2 : i32
    %23 = arith.addi %16, %c2_i32_2 : i32
    %24 = arith.index_cast %23 : i32 to index
    %25 = memref.load %arg2[%24] : memref<18xf32, #tpu.memory_space<smem>>
    %c3_i32 = arith.constant 3 : i32
    %26 = arith.addi %16, %c3_i32 : i32
    %27 = arith.index_cast %26 : i32 to index
    %28 = memref.load %arg2[%27] : memref<18xf32, #tpu.memory_space<smem>>
    %c4_i32_3 = arith.constant 4 : i32
    %29 = arith.addi %16, %c4_i32_3 : i32
    %30 = arith.index_cast %29 : i32 to index
    %31 = memref.load %arg2[%30] : memref<18xf32, #tpu.memory_space<smem>>
    %c5_i32 = arith.constant 5 : i32
    %32 = arith.addi %16, %c5_i32 : i32
    %33 = arith.index_cast %32 : i32 to index
    %34 = memref.load %arg2[%33] : memref<18xf32, #tpu.memory_space<smem>>
    %c6_i32 = arith.constant 6 : i32
    %35 = arith.addi %16, %c6_i32 : i32
    %36 = arith.index_cast %35 : i32 to index
    %37 = memref.load %arg2[%36] : memref<18xf32, #tpu.memory_space<smem>>
    %c7_i32 = arith.constant 7 : i32
    %38 = arith.addi %16, %c7_i32 : i32
    %39 = arith.index_cast %38 : i32 to index
    %40 = memref.load %arg2[%39] : memref<18xf32, #tpu.memory_space<smem>>
    %c8_i32_4 = arith.constant 8 : i32
    %41 = arith.addi %16, %c8_i32_4 : i32
    %42 = arith.index_cast %41 : i32 to index
    %43 = memref.load %arg2[%42] : memref<18xf32, #tpu.memory_space<smem>>
    %44 = vector.broadcast %19 : f32 to vector<2x128xf32>
    %45 = arith.mulf %44, %12 : vector<2x128xf32>
    %46 = vector.broadcast %22 : f32 to vector<2x128xf32>
    %47 = arith.mulf %46, %13 : vector<2x128xf32>
    %48 = arith.addf %45, %47 : vector<2x128xf32>
    %49 = vector.broadcast %25 : f32 to vector<2x128xf32>
    %50 = arith.addf %48, %49 : vector<2x128xf32>
    %51 = arith.mulf %15, %50 : vector<2x128xf32>
    %c0_5 = arith.constant 0 : index
    %c0_6 = arith.constant 0 : index
    %c0_7 = arith.constant 0 : index
    %c0_8 = arith.constant 0 : index
    %52 = vector.load %arg4[%c0_5, %c0_6, %c0_7, %c0_8] : memref<1x4x2x128xf32, #tpu.memory_space<vmem>>, vector<1x1x2x128xf32>
    %53 = vector.shape_cast %52 : vector<1x1x2x128xf32> to vector<2x128xf32>
    %54 = vector.shape_cast %51 : vector<2x128xf32> to vector<1x1x2x128xf32>
    tpu.vector_store %arg4[%c0_5, %c0_6, %c0_7, %c0_8], %54 {strides = array<i32>} : memref<1x4x2x128xf32, #tpu.memory_space<vmem>>, vector<1x1x2x128xf32>,
    %55 = vector.broadcast %28 : f32 to vector<2x128xf32>
    %56 = arith.mulf %55, %12 : vector<2x128xf32>
    %57 = vector.broadcast %31 : f32 to vector<2x128xf32>
    %58 = arith.mulf %57, %13 : vector<2x128xf32>
    %59 = arith.addf %56, %58 : vector<2x128xf32>
    %60 = vector.broadcast %34 : f32 to vector<2x128xf32>
    %61 = arith.addf %59, %60 : vector<2x128xf32>
    %62 = arith.mulf %15, %61 : vector<2x128xf32>
    %c0_9 = arith.constant 0 : index
    %c1 = arith.constant 1 : index
    %c0_10 = arith.constant 0 : index
    %c0_11 = arith.constant 0 : index
    %63 = vector.load %arg4[%c0_9, %c1, %c0_10, %c0_11] : memref<1x4x2x128xf32, #tpu.memory_space<vmem>>, vector<1x1x2x128xf32>
    %64 = vector.shape_cast %63 : vector<1x1x2x128xf32> to vector<2x128xf32>
    %65 = vector.shape_cast %62 : vector<2x128xf32> to vector<1x1x2x128xf32>
    tpu.vector_store %arg4[%c0_9, %c1, %c0_10, %c0_11], %65 {strides = array<i32>} : memref<1x4x2x128xf32, #tpu.memory_space<vmem>>, vector<1x1x2x128xf32>,
    %66 = vector.broadcast %37 : f32 to vector<2x128xf32>
    %67 = arith.mulf %66, %12 : vector<2x128xf32>
    %68 = vector.broadcast %40 : f32 to vector<2x128xf32>
    %69 = arith.mulf %68, %13 : vector<2x128xf32>
    %70 = arith.addf %67, %69 : vector<2x128xf32>
    %71 = vector.broadcast %43 : f32 to vector<2x128xf32>
    %72 = arith.addf %70, %71 : vector<2x128xf32>
    %73 = arith.mulf %15, %72 : vector<2x128xf32>
    %c0_12 = arith.constant 0 : index
    %c2 = arith.constant 2 : index
    %c0_13 = arith.constant 0 : index
    %c0_14 = arith.constant 0 : index
    %74 = vector.load %arg4[%c0_12, %c2, %c0_13, %c0_14] : memref<1x4x2x128xf32, #tpu.memory_space<vmem>>, vector<1x1x2x128xf32>
    %75 = vector.shape_cast %74 : vector<1x1x2x128xf32> to vector<2x128xf32>
    %76 = vector.shape_cast %73 : vector<2x128xf32> to vector<1x1x2x128xf32>
    tpu.vector_store %arg4[%c0_12, %c2, %c0_13, %c0_14], %76 {strides = array<i32>} : memref<1x4x2x128xf32, #tpu.memory_space<vmem>>, vector<1x1x2x128xf32>,
    %cst = arith.constant 1.000000e+00 : f32
    %77 = vector.broadcast %cst : f32 to vector<2x128xf32>
    %c0_15 = arith.constant 0 : index
    %c3 = arith.constant 3 : index
    %c0_16 = arith.constant 0 : index
    %c0_17 = arith.constant 0 : index
    %78 = vector.load %arg4[%c0_15, %c3, %c0_16, %c0_17] : memref<1x4x2x128xf32, #tpu.memory_space<vmem>>, vector<1x1x2x128xf32>
    %79 = vector.shape_cast %78 : vector<1x1x2x128xf32> to vector<2x128xf32>
    %80 = vector.shape_cast %77 : vector<2x128xf32> to vector<1x1x2x128xf32>
    tpu.vector_store %arg4[%c0_15, %c3, %c0_16, %c0_17], %80 {strides = array<i32>} : memref<1x4x2x128xf32, #tpu.memory_space<vmem>>, vector<1x1x2x128xf32>,
    return
  }
  func.func @transform_0(%arg0: i32, %arg1: i32) -> i32 {
    %c0_i32 = arith.constant 0 : i32
    %c0_i32_0 = arith.constant 0 : i32
    return %c0_i32 : i32
  }
  func.func @transform_1(%arg0: i32, %arg1: i32) -> (i32, i32, i32) {
    %c0_i32 = arith.constant 0 : i32
    %c0_i32_0 = arith.constant 0 : i32
    return %arg0, %arg1, %c0_i32 : i32, i32, i32
  }
  func.func @transform_2(%arg0: i32, %arg1: i32) -> (i32, i32, i32, i32) {
    %c0_i32 = arith.constant 0 : i32
    %c0_i32_0 = arith.constant 0 : i32
    %c0_i32_1 = arith.constant 0 : i32
    return %arg0, %c0_i32, %arg1, %c0_i32_0 : i32, i32, i32, i32
  }
}

</mosaic_0001>

<llo_original>
// kernel: tpu_custom_call.1
$region0: #{tpu_custom_call.1}
  #allocation0 [shape = 'u32[]', space=smem, size = 0x4, offset = 0x4, fixed_abs, tag = 'smem constant byte address 0x4 - core index']
  #allocation1 [shape = 'u32[144,128]{1,0:T(1,128)}', space=vmem, size = 0x12000, scoped, tag = 'internal scratch']
  %s0 = inlined_call_operand.hbm [shape: f32[18], index: 0, kind: input, shape index: {}]
  %s1 = inlined_call_operand.hbm [shape: f32[2,2,128], index: 1, kind: input, shape index: {}]
  %s2 = inlined_call_operand.hbm [shape: f32[2,4,2,128], index: 2, kind: output, shape index: {}]
  %s3 = sld [smem:[#allocation0]]
  $region49: #{tpu_custom_call.1} parent=0
    _
  %s5 = ssub.s32 1, %s3
  %s6 = scalar_select 0, %s5, %s3
  $region1: #{tpu_custom_call.1} parent=0
    #allocation2 [shape = 'u8[512]{0}', space=smem, size = 0x200, scoped, tag = 'input window, operand 0, single buffered']
    #allocation3 [shape = 's32[2]{0}', space=sflag, size = 0x8, scoped, tag = 'scoped memory for tpu_custom_call.1']
    #allocation4 [shape = 's32[2]{0}', space=sflag, size = 0x8, scoped, tag = 'scoped memory for tpu_custom_call.1']
    #allocation5 [shape = 's32[2]{0}', space=sflag, size = 0x8, scoped, tag = 'scoped memory for tpu_custom_call.1']
    #allocation6 [shape = 'u8[2048]{0}', space=vmem, size = 0x800, scoped, tag = 'input window, operand 1']
    #allocation7 [shape = 'u8[8192]{0}', space=vmem, size = 0x2000, scoped, tag = 'output window, operand 0']
    %7 = vsyncpa [#allocation5], 0
    %8 = vsyncpa [#allocation3], 0
    %s9 = scalar_lea.sflag [#allocation3], 1
    %10 = vsyncpa %s9, 0
    %11 = vsyncpa [#allocation4], 0
    %s12 = scalar_lea.sflag [#allocation4], 1
    %13 = vsyncpa %s12, 0
    loop: start=0, step=1, limit=4
    $region2: #{tpu_custom_call.1} parent=1 // loop_pre_header
      _
    $region3: #{tpu_custom_call.1} parent=1 // loop_header
      %s15 = sphi 0, %s19
      %p16 = scmp.ge.s32.totalorder %s15, 4
      %s22 = sphi 0, %s34
      %s23 = sphi 0, %s30
      %s24 = sphi 0, %s22
      %s25 = sphi 0, %s23
      %s26 = sphi 0, %s24
      %s27 = sphi 0, %s25
      %s35 = sphi 0, %s35
      %s37 = sphi 0, %s35
      %s38 = sphi 0, %s37
      %s52 = sphi 0, %s38
      %s60 = sphi 0, %s62
      %s63 = sphi 0, %s60
      %s64 = sphi 0, %s63
      %s80 = sphi 0, %s64
      %s88 = sphi 0, %s90
      %s91 = sphi 0, %s88
      %s92 = sphi 0, %s91
      %s108 = sphi 0, %s92
    $region4: #{tpu_custom_call.1} parent=1 // loop_header_branch
      %18 = sbr.rel (%p16) target = $region8
    $region5: #{tpu_custom_call.1} parent=1 // loop_body
      %s20 = ssub.s32 %s15, 1
      %s21 = ssub.s32 %s15, 2
      %s28 = sadd.s32 1, %s23
      %p29 = scmp.ge.s32.totalorder %s28, 1
      %s30 = scalar_select %p29, 0, %s28
      %s31 = sadd.s32 1, %s22
      %s32 = scalar_select %p29, %s31, %s22
      %p33 = scmp.ge.s32.totalorder %s32, 2
      %s34 = scalar_select %p33, 0, %s32
      %s36 = sadd.s32 %s35, 1
      %p39 = scmp.eq.s32.totalorder %s15, 1
      %p40 = scmp.ne.s32.totalorder %s35, %s37
      %p41 = scmp.eq.s32.totalorder %s15, 0
      %p42 = por %p40, %p41
      %p43 = scmp.ne.s32.totalorder %s35, %s37
      %p44 = scmp.eq.s32.totalorder %s20, 1
      %p45 = por %p43, %p44
      %p46 = scmp.ne.s32.totalorder %s37, %s38
      %p47 = scmp.eq.s32.totalorder %s20, 0
      %p48 = por %p46, %p47
      %p49 = scmp.ne.s32.totalorder %s37, %s38
      %p50 = scmp.eq.s32.totalorder %s21, 1
      %p51 = por %p49, %p50
      %p53 = scmp.ne.s32.totalorder %s38, %s52
      %p54 = scmp.eq.s32.totalorder %s21, 0
      %p55 = por %p53, %p54
      %s56 = ssub.s32 %s22, %s34
      %s57 = ssub.s32 %s23, %s30
      %s58 = sor.u32 %s56, %s57
      %p59 = scmp.eq.s32.totalorder %s58, 0
      %s61 = sadd.s32 %s60, 1
      %s62 = scalar_select %p59, %s60, %s61
      %p65 = pneg %p59
      %p66 = scmp.eq.s32.totalorder %s15, 1
      %p67 = por %p65, %p66
      %p68 = scmp.ne.s32.totalorder %s60, %s63
      %p69 = scmp.eq.s32.totalorder %s15, 0
      %p70 = por %p68, %p69
      %p71 = scmp.ne.s32.totalorder %s60, %s63
      %p72 = scmp.eq.s32.totalorder %s20, 1
      %p73 = por %p71, %p72
      %p74 = scmp.ne.s32.totalorder %s63, %s64
      %p75 = scmp.eq.s32.totalorder %s20, 0
      %p76 = por %p74, %p75
      %p77 = scmp.ne.s32.totalorder %s63, %s64
      %p78 = scmp.eq.s32.totalorder %s21, 1
      %p79 = por %p77, %p78
      %p81 = scmp.ne.s32.totalorder %s64, %s80
      %p82 = scmp.eq.s32.totalorder %s21, 0
      %p83 = por %p81, %p82
      %s84 = ssub.s32 %s22, %s34
      %s85 = ssub.s32 %s23, %s30
      %s86 = sor.u32 %s84, %s85
      %p87 = scmp.eq.s32.totalorder %s86, 0
      %s89 = sadd.s32 %s88, 1
      %s90 = scalar_select %p87, %s88, %s89
      %p93 = pneg %p87
      %p94 = scmp.eq.s32.totalorder %s15, 1
      %p95 = por %p93, %p94
      %p96 = scmp.ne.s32.totalorder %s88, %s91
      %p97 = scmp.eq.s32.totalorder %s15, 0
      %p98 = por %p96, %p97
      %p99 = scmp.ne.s32.totalorder %s88, %s91
      %p100 = scmp.eq.s32.totalorder %s20, 1
      %p101 = por %p99, %p100
      %p102 = scmp.ne.s32.totalorder %s91, %s92
      %p103 = scmp.eq.s32.totalorder %s20, 0
      %p104 = por %p102, %p103
      %p105 = scmp.ne.s32.totalorder %s91, %s92
      %p106 = scmp.eq.s32.totalorder %s21, 1
      %p107 = por %p105, %p106
      %p109 = scmp.ne.s32.totalorder %s92, %s108
      %p110 = scmp.eq.s32.totalorder %s21, 0
      %p111 = por %p109, %p110
      %p112 = scmp.le.s32.totalorder 1, %s15
      %p113 = scmp.lt.s32.totalorder %s15, 3
      %p114 = pnand %p112, %p113
      %p115 = pneg %p114
      // Predicated region
      $region9: #{tpu_custom_call.1} parent=5 // pred_check
        _
      $region10: #{tpu_custom_call.1} parent=5 // pred_check_branch
        %117 = sbr.rel (%p114) target = $region12
      $region11: #{tpu_custom_call.1} parent=5 // pred_region
        %s118 = ssub.s32 %s15, 1
        // Predicated region
        $region13: #{tpu_custom_call.1} parent=11 // pred_check
          %p119 = pneg %p48
        $region14: #{tpu_custom_call.1} parent=11 // pred_check_branch
          %121 = sbr.rel (%p119) target = $region16
        $region15: #{tpu_custom_call.1} parent=11 // pred_region
          %s123 = ssub.s32 16, 16
          %124 = vsyncadd [#allocation5], %s123
          %127 = dma.hbm_to_smem %s0, 16, [#allocation2], [#allocation5]
        $region16: #{tpu_custom_call.1} parent=11 // pred_fallthru
          _
      $region12: #{tpu_custom_call.1} parent=5 // pred_fallthru
        _
      %p128 = scmp.lt.s32.totalorder %s15, 2
      // Predicated region
      $region17: #{tpu_custom_call.1} parent=5 // pred_check
        %p129 = pneg %p128
      $region18: #{tpu_custom_call.1} parent=5 // pred_check_branch
        %131 = sbr.rel (%p129) target = $region20
      $region19: #{tpu_custom_call.1} parent=5 // pred_region
        // Predicated region
        $region21: #{tpu_custom_call.1} parent=19 // pred_check
          %p132 = pneg %p70
        $region22: #{tpu_custom_call.1} parent=19 // pred_check_branch
          %134 = sbr.rel (%p132) target = $region24
        $region23: #{tpu_custom_call.1} parent=19 // pred_region
          %s135 = sand.u32 %s60, 1
          %s136 = scalar_lea.sflag [#allocation3], %s135
          %s137 = sand.u32 %s60, 1
          %s138 = smul.addr %s137, 2
          %s139 = scalar_lea.vmem [#allocation6], %s138
          %s141 = ssub.s32 32, 32
          %142 = vsyncadd %s136, %s141
          %s143 = sadd.s32 %s23, %s22
          %s144 = smul.addr %s143, 32
          %s145 = scalar_lea.hbm %s1, %s144
          %s147 = sshll.u32 %s139, 4
          %s148 = int_to_ptr.vmem [resolvable:$true] %s147
          %150 = dma.hbm_to_vmem [thread:$0]  %s145, 32, %s148, %s136
        $region24: #{tpu_custom_call.1} parent=19 // pred_fallthru
          _
      $region20: #{tpu_custom_call.1} parent=5 // pred_fallthru
        _
      %p151 = scmp.le.s32.totalorder 1, %s15
      %p152 = scmp.lt.s32.totalorder %s15, 3
      %p153 = pnand %p151, %p152
      %p154 = pneg %p153
      // Predicated region
      $region25: #{tpu_custom_call.1} parent=5 // pred_check
        _
      $region26: #{tpu_custom_call.1} parent=5 // pred_check_branch
        %156 = sbr.rel (%p153) target = $region28
      $region27: #{tpu_custom_call.1} parent=5 // pred_region
        %s157 = ssub.s32 %s15, 1
        // Predicated region
        $region29: #{tpu_custom_call.1} parent=27 // pred_check
          %p158 = pneg %p48
        $region30: #{tpu_custom_call.1} parent=27 // pred_check_branch
          %160 = sbr.rel (%p158) target = $region32
        $region31: #{tpu_custom_call.1} parent=27 // pred_region
          %161 = dma.done [#allocation5], 16
        $region32: #{tpu_custom_call.1} parent=27 // pred_fallthru
          _
        %s162 = sand.u32 %s63, 1
        %s163 = scalar_lea.sflag [#allocation3], %s162
        %s164 = sand.u32 %s63, 1
        %s165 = smul.addr %s164, 2
        %s166 = scalar_lea.vmem [#allocation6], %s165
        // Predicated region
        $region33: #{tpu_custom_call.1} parent=27 // pred_check
          %p167 = pneg %p76
        $region34: #{tpu_custom_call.1} parent=27 // pred_check_branch
          %169 = sbr.rel (%p167) target = $region36
        $region35: #{tpu_custom_call.1} parent=27 // pred_region
          %170 = dma.done %s163, 32
        $region36: #{tpu_custom_call.1} parent=27 // pred_fallthru
          _
        %171 = sfence
        %p172 = pneg %p48
        %p173 = pneg %p45
        %s174 = sand.u32 %s63, 1
        %s175 = scalar_lea.sflag [#allocation3], %s174
        %s176 = sand.u32 %s63, 1
        %s177 = smul.addr %s176, 2
        %s178 = scalar_lea.vmem [#allocation6], %s177
        %p179 = pneg %p76
        %p180 = pneg %p73
        %p181 = pneg %p104
        %p182 = pneg %p101
        %s183 = sand.u32 %s91, 1
        %s184 = scalar_lea.sflag [#allocation4], %s183
        %s185 = sand.u32 %s91, 1
        %s186 = smul.addr %s185, 8
        %s187 = scalar_lea.vmem [#allocation7], %s186
        %v188 = vlaneseq
        %v189 = vshrl.u32 %v188, 7
        %v190 = vlaneseq
        %v191 = vand.u32 %v190, 127
        %s192 = smul.u32 %s25, 2
        %v193 = vstv %s192
        %v194 = vadd.s32 %v193, %v189
        %v195 = vmul.u32 %v194, 8
        %v196 = vshra.s32 %v191, 4
        %v197 = vadd.s32 %v195, %v196
        %v198 = vand.u32 %v191, 15
        %v199 = vcvt.s32.f32 %v198
        %v200 = vcvt.s32.f32 %v197
        %v201 = vld [vmem:[%s166] sm:$0x3]
        %s202 = smul.u32 %s24, 9
        %s203 = sld [smem:[#allocation2 + %s202]]
        %s204 = sadd.s32 %s202, 1
        %s205 = sld [smem:[#allocation2 + %s204]]
        %s206 = sadd.s32 %s202, 2
        %s207 = sld [smem:[#allocation2 + %s206]]
        %s208 = sadd.s32 %s202, 3
        %s209 = sld [smem:[#allocation2 + %s208]]
        %s210 = sadd.s32 %s202, 4
        %s211 = sld [smem:[#allocation2 + %s210]]
        %s212 = sadd.s32 %s202, 5
        %s213 = sld [smem:[#allocation2 + %s212]]
        %s214 = sadd.s32 %s202, 6
        %s215 = sld [smem:[#allocation2 + %s214]]
        %s216 = sadd.s32 %s202, 7
        %s217 = sld [smem:[#allocation2 + %s216]]
        %s218 = sadd.s32 %s202, 8
        %s219 = sld [smem:[#allocation2 + %s218]]
        %v220 = vstv %s203
        %v221 = vmul.f32 %v220, %v199
        %v222 = vstv %s205
        %v223 = vmul.f32 %v222, %v200
        %v224 = vadd.f32 %v221, %v223
        %v225 = vstv %s207
        %v226 = vadd.f32 %v224, %v225
        %v227 = vmul.f32 %v201, %v226
        %228 = vst [vmem:[%s187] sm:$0x3] %v227
        %v229 = vstv %s209
        %v230 = vmul.f32 %v229, %v199
        %v231 = vstv %s211
        %v232 = vmul.f32 %v231, %v200
        %v233 = vadd.f32 %v230, %v232
        %v234 = vstv %s213
        %v235 = vadd.f32 %v233, %v234
        %v236 = vmul.f32 %v201, %v235
        %s237 = scalar_lea.vmem %s187, 2 [#allocation7]
        %238 = vst [vmem:[%s237] sm:$0x3] %v236
        %v239 = vstv %s215
        %v240 = vmul.f32 %v239, %v199
        %v241 = vstv %s217
        %v242 = vmul.f32 %v241, %v200
        %v243 = vadd.f32 %v240, %v242
        %v244 = vstv %s219
        %v245 = vadd.f32 %v243, %v244
        %v246 = vmul.f32 %v201, %v245
        %s247 = scalar_lea.vmem %s187, 4 [#allocation7]
        %248 = vst [vmem:[%s247] sm:$0x3] %v246
        %s249 = scalar_lea.vmem %s187, 6 [#allocation7]
        %250 = vst [vmem:[%s249] sm:$0x3] 1.0
        %s251 = sand.u32 %s91, 1
        %s252 = scalar_lea.sflag [#allocation4], %s251
        %s253 = sand.u32 %s91, 1
        %s254 = smul.addr %s253, 8
        %s255 = scalar_lea.vmem [#allocation7], %s254
        // Predicated region
        $region37: #{tpu_custom_call.1} parent=27 // pred_check
          %p256 = pneg %p101
        $region38: #{tpu_custom_call.1} parent=27 // pred_check_branch
          %258 = sbr.rel (%p256) target = $region40
        $region39: #{tpu_custom_call.1} parent=27 // pred_region
          %s260 = ssub.s32 128, 128
          %261 = vsyncadd %s252, %s260
          %s262 = smul.addr %s24, 4
          %s263 = sadd.s32 %s25, %s262
          %s264 = smul.addr %s263, 32
          %s265 = scalar_lea.hbm %s2, %s264
          %s266 = sshll.u32 %s255, 4
          %s267 = int_to_ptr.vmem [resolvable:$true] %s266
          %272 = dma.vmem_to_hbm [thread:$0]  %s267, 128, %s265, %s252, 32, 32, 2
        $region40: #{tpu_custom_call.1} parent=27 // pred_fallthru
          _
      $region28: #{tpu_custom_call.1} parent=5 // pred_fallthru
        _
      %p273 = scmp.le.s32.totalorder 2, %s15
      // Predicated region
      $region41: #{tpu_custom_call.1} parent=5 // pred_check
        %p274 = pneg %p273
      $region42: #{tpu_custom_call.1} parent=5 // pred_check_branch
        %276 = sbr.rel (%p274) target = $region44
      $region43: #{tpu_custom_call.1} parent=5 // pred_region
        %s277 = ssub.s32 %s15, 2
        // Predicated region
        $region45: #{tpu_custom_call.1} parent=43 // pred_check
          %p278 = pneg %p107
        $region46: #{tpu_custom_call.1} parent=43 // pred_check_branch
          %280 = sbr.rel (%p278) target = $region48
        $region47: #{tpu_custom_call.1} parent=43 // pred_region
          %s281 = sand.u32 %s92, 1
          %s282 = scalar_lea.sflag [#allocation4], %s281
          %s283 = sand.u32 %s92, 1
          %s284 = smul.addr %s283, 8
          %s285 = scalar_lea.vmem [#allocation7], %s284
          %286 = dma.done %s282, 128
        $region48: #{tpu_custom_call.1} parent=43 // pred_fallthru
          _
      $region44: #{tpu_custom_call.1} parent=5 // pred_fallthru
        _
    $region6: #{tpu_custom_call.1} parent=1 // loop_footer
      %s19 = sadd.s32 1, %s15
    $region7: #{tpu_custom_call.1} parent=1 // loop_footer_branch
      %14 = sbr.rel target = $region3
    $region8: #{tpu_custom_call.1} parent=1 // loop_exit
      _
    %287 = vsyncpa [#allocation3], 1
    %s288 = scalar_lea.sflag [#allocation3], 1
    %289 = vsyncpa %s288, 1
    %290 = vsyncpa [#allocation4], 1
    %s291 = scalar_lea.sflag [#allocation4], 1
    %292 = vsyncpa %s291, 1
    %293 = vsyncpa [#allocation5], 1
    %s294 = scalar_lea.sflag [#allocation5], 1
    %295 = vsyncpa %s294, 1

</llo_original>
